<compile_context>
chip_gen: v7x
topology: tpu7x:2x2x1
jax: 0.10.0
libtpu: 0.0.40
codegen_flags: <defaults>
</compile_context>

<pallas_src>
import math
import jax
import jax.numpy as jnp
from jax.experimental import pallas as pl
from jax.experimental.pallas import tpu as pltpu

# Small shapes standing in for Phi-4-mini (real model: V=200064, H=3072).
B, S, H, V, C = 2, 8, 32, 256, 5
C_PAD = 128     # lane-dense padding of the 5-wide classifier output


def custom_model_kernel(x_ref, mask_ref, wf_ref, bc_ref, out_ref):
    x = x_ref[...]          # [B, S, H] f32 token embeddings
    m = mask_ref[...]       # [B, S]    f32 attention mask (1 = keep, 0 = pad)

    # --- stand-in causal self-attention, ROW q=0 ONLY ---
    # Downstream only consumes the first token, and causality means q=0 can only
    # see k=0, so the full [B,S,S] score/softmax/attention block is dead compute.
    scale = jnp.float32(1.0 / math.sqrt(H))
    q0 = x[:, 0, :]                                                    # [B, H]
    scores0 = jnp.sum(q0[:, None, :] * x, axis=-1) * scale             # [B, S]
    k_idx = jax.lax.broadcasted_iota(jnp.int32, (B, S), 1)
    keep = jnp.logical_and(k_idx == 0, m > 0.5)                        # causal row 0
    scores0 = jnp.where(keep, scores0, jnp.float32(-1e30))
    scores0 = scores0 - jnp.max(scores0, axis=-1, keepdims=True)
    p0 = jnp.exp(scores0)
    p0 = p0 * pl.reciprocal(jnp.sum(p0, axis=-1, keepdims=True), approx=True)
    attn0 = jnp.sum(p0[:, :, None] * x, axis=1)                        # [B, H]

    # --- dropout(p=0.05) is identity at eval; LM head folded into classifier ---
    # TODO(synk): training-mode stochastic dropout on the [B,V] logits would break
    # the w_lm@w_c fusion; it would need pltpu.prng_seed + pltpu.stateful_bernoulli
    # and an explicit V-tiled LM-head matmul (bf16 weights, "parallel" vocab grid).
    out_ref[...] = (jnp.dot(attn0.astype(jnp.bfloat16), wf_ref[...],
                            preferred_element_type=jnp.float32)
                    + bc_ref[...])                                     # [B, C_PAD]


def custom_model_forward(input_ids, attn_mask, params):
    """input_ids: [B, S] int32, attn_mask: [B, S] int32 -> logits [B, C] f32."""
    x = params['embedding'][input_ids].astype(jnp.float32)   # glue: embedding lookup
    m = attn_mask.astype(jnp.float32)

    # Eval-mode fusion of LM head and classifier: (h @ w_lm) @ w_c == h @ (w_lm @ w_c).
    # Removes the vocab dimension from the kernel entirely; fused weight is H*C_PAD.
    w_fused = jnp.dot(params['w_lm'], params['w_c'],
                      preferred_element_type=jnp.float32)              # [H, C]
    w_fused = jnp.pad(w_fused, ((0, 0), (0, C_PAD - C))).astype(jnp.bfloat16)
    b_c = jnp.pad(params['b_c'], ((0, 0), (0, C_PAD - C))).astype(jnp.float32)

    out_padded = pl.pallas_call(
        custom_model_kernel,
        out_shape=jax.ShapeDtypeStruct((B, C_PAD), jnp.float32),
        grid=(1,),
        in_specs=[
            pl.BlockSpec((B, S, H), lambda i: (0, 0, 0)),
            pl.BlockSpec((B, S), lambda i: (0, 0)),
            pl.BlockSpec((H, C_PAD), lambda i: (0, 0)),
            pl.BlockSpec((1, C_PAD), lambda i: (0, 0)),
        ],
        out_specs=pl.BlockSpec((B, C_PAD), lambda i: (0, 0)),
        # Everything fits in one tiny block at these stand-in shapes; at real scale
        # the batch axis (or a tiled vocab axis, if the fusion were disallowed)
        # would be a "parallel" grid axis so v7x's two TensorCores both work.
        compiler_params=pltpu.CompilerParams(dimension_semantics=("arbitrary",)),
    )(x, m, w_fused, b_c)
    return out_padded[:, :C]


def reference_forward(input_ids, attn_mask, params):
    """Pure-JAX reference with the original module's semantics (full attention,
    full [B,S,V] LM logits, classifier on first-token logits)."""
    x = params['embedding'][input_ids].astype(jnp.float32)
    m = attn_mask.astype(jnp.float32)
    scale = 1.0 / math.sqrt(H)
    scores = jnp.einsum('bqh,bkh->bqk', x, x) * scale
    q_idx = jax.lax.broadcasted_iota(jnp.int32, (S, S), 0)
    k_idx = jax.lax.broadcasted_iota(jnp.int32, (S, S), 1)
    keep = jnp.logical_and((k_idx <= q_idx)[None], m[:, None, :] > 0.5)
    scores = jnp.where(keep, scores, -1e30)
    p = jax.nn.softmax(scores, axis=-1)
    attn = jnp.einsum('bqk,bkh->bqh', p, x)
    logits = jnp.einsum('bsh,hv->bsv', attn, params['w_lm'])
    first = logits[:, 0, :]
    return first @ params['w_c'] + params['b_c']


def make_params(key):
    k_emb, k_lm, k_c, k_b = jax.random.split(key, 4)
    return {
        'embedding': jax.random.normal(k_emb, (V, H), jnp.float32) * 0.02,
        'w_lm':      jax.random.normal(k_lm, (H, V), jnp.float32) * 0.02,
        'w_c':       jax.random.normal(k_c, (V, C), jnp.float32) * 0.02,
        'b_c':       jax.random.normal(k_b, (1, C), jnp.float32) * 0.02,
    }


if __name__ == "__main__":
    key = jax.random.PRNGKey(0)
    k_params, k_ids = jax.random.split(key)
    params = make_params(k_params)

    input_ids = jax.random.randint(k_ids, (B, S), 0, V, dtype=jnp.int32)
    # Second sequence has two padding positions at the end (mask = 0).
    attn_mask = jnp.array([[1, 1, 1, 1, 1, 1, 1, 1],
                           [1, 1, 1, 1, 1, 1, 0, 0]], dtype=jnp.int32)

    out = custom_model_forward(input_ids, attn_mask, params)
    out = jax.block_until_ready(out)

    ref = reference_forward(input_ids, attn_mask, params)
    assert out.shape == (B, C)
    assert jnp.allclose(out, ref, atol=1e-4, rtol=1e-4), (out, ref)

    print("KERNEL_OK")
</pallas_src>

<mosaic_0001>
module attributes {stable_mosaic.version = 11 : i64} {
  func.func @custom_model_kernel(%arg0: i32, %arg1: memref<2x8x32xf32, #tpu.memory_space<vmem>>, %arg2: memref<2x8xf32, #tpu.memory_space<vmem>>, %arg3: memref<32x128xbf16, #tpu.memory_space<vmem>>, %arg4: memref<1x128xf32, #tpu.memory_space<vmem>>, %arg5: memref<2x128xf32, #tpu.memory_space<vmem>>) attributes {dimension_semantics = [#tpu.dimension_semantics<arbitrary>], iteration_bounds = array<i64: 1>, scalar_prefetch = 0 : i64, scratch_operands = 0 : i64, tpu.core_type = #tpu.core_type<tc>, window_params = [{pipeline_mode = #tpu.pipeline_mode<synchronous>, transform_indices = @transform_0, window_bounds = array<i64: 2, 8, 32>}, {pipeline_mode = #tpu.pipeline_mode<synchronous>, transform_indices = @transform_1, window_bounds = array<i64: 2, 8>}, {pipeline_mode = #tpu.pipeline_mode<synchronous>, transform_indices = @transform_2, window_bounds = array<i64: 32, 128>}, {pipeline_mode = #tpu.pipeline_mode<synchronous>, transform_indices = @transform_3, window_bounds = array<i64: 1, 128>}, {pipeline_mode = #tpu.pipeline_mode<synchronous>, transform_indices = @transform_4, window_bounds = array<i64: 2, 128>}]} {
    %c0 = arith.constant 0 : index
    %c0_0 = arith.constant 0 : index
    %c0_1 = arith.constant 0 : index
    %0 = vector.load %arg1[%c0, %c0_0, %c0_1] : memref<2x8x32xf32, #tpu.memory_space<vmem>>, vector<2x8x32xf32>
    %c0_2 = arith.constant 0 : index
    %c0_3 = arith.constant 0 : index
    %1 = vector.load %arg2[%c0_2, %c0_3] : memref<2x8xf32, #tpu.memory_space<vmem>>, vector<2x8xf32>
    %2 = vector.extract_strided_slice %0 {offsets = [0, 0, 0], sizes = [2, 1, 32], strides = [1, 1, 1]} : vector<2x8x32xf32> to vector<2x1x32xf32>
    %3 = vector.shape_cast %2 : vector<2x1x32xf32> to vector<2x32xf32>
    %4 = vector.shape_cast %3 : vector<2x32xf32> to vector<2x1x32xf32>
    %5 = vector.broadcast %4 : vector<2x1x32xf32> to vector<2x8x32xf32>
    %6 = arith.mulf %5, %0 : vector<2x8x32xf32>
    %cst = arith.constant dense<0.000000e+00> : vector<2x8xf32>
    %7 = vector.multi_reduction <add>, %6, %cst [2] : vector<2x8x32xf32> to vector<2x8xf32>
    %cst_4 = arith.constant 0.176776692 : f32
    %8 = vector.broadcast %cst_4 : f32 to vector<2x8xf32>
    %9 = arith.mulf %7, %8 : vector<2x8xf32>
    %10 = tpu.iota {dimensions = array<i32: 1>} : vector<2x8xi32>
    %c0_i32 = arith.constant 0 : i32
    %11 = vector.broadcast %c0_i32 : i32 to vector<2x8xi32>
    %12 = arith.cmpi eq, %10, %11 : vector<2x8xi32>
    %cst_5 = arith.constant 5.000000e-01 : f32
    %13 = vector.broadcast %cst_5 : f32 to vector<2x8xf32>
    %14 = arith.cmpf ogt, %1, %13 : vector<2x8xf32>
    %15 = arith.andi %12, %14 : vector<2x8xi1>
    %cst_6 = arith.constant -1.000000e+30 : f32
    %16 = vector.broadcast %cst_6 : f32 to vector<2x8xf32>
    %17 = arith.select %15, %9, %16 : vector<2x8xi1>, vector<2x8xf32>
    %cst_7 = arith.constant dense<0xFF800000> : vector<2xf32>
    %18 = vector.multi_reduction <maximumf>, %17, %cst_7 [1] : vector<2x8xf32> to vector<2xf32>
    %19 = vector.shape_cast %18 : vector<2xf32> to vector<2x1xf32>
    %20 = vector.broadcast %19 : vector<2x1xf32> to vector<2x8xf32>
    %21 = arith.subf %17, %20 : vector<2x8xf32>
    %22 = math.exp %21 : vector<2x8xf32>
    %cst_8 = arith.constant dense<0.000000e+00> : vector<2xf32>
    %23 = vector.multi_reduction <add>, %22, %cst_8 [1] : vector<2x8xf32> to vector<2xf32>
    %24 = vector.shape_cast %23 : vector<2xf32> to vector<2x1xf32>
    %25 = tpu.reciprocal %24 {approx = true} : vector<2x1xf32> -> vector<2x1xf32>
    %26 = vector.broadcast %25 : vector<2x1xf32> to vector<2x8xf32>
    %27 = arith.mulf %22, %26 : vector<2x8xf32>
    %28 = vector.shape_cast %27 : vector<2x8xf32> to vector<2x8x1xf32>
    %29 = vector.broadcast %28 : vector<2x8x1xf32> to vector<2x8x32xf32>
    %30 = arith.mulf %29, %0 : vector<2x8x32xf32>
    %cst_9 = arith.constant dense<0.000000e+00> : vector<2x32xf32>
    %31 = vector.multi_reduction <add>, %30, %cst_9 [1] : vector<2x8x32xf32> to vector<2x32xf32>
    %32 = arith.truncf %31 : vector<2x32xf32> to vector<2x32xbf16>
    %c0_10 = arith.constant 0 : index
    %c0_11 = arith.constant 0 : index
    %33 = vector.load %arg3[%c0_10, %c0_11] : memref<32x128xbf16, #tpu.memory_space<vmem>>, vector<32x128xbf16>
    %cst_12 = arith.constant dense<0.000000e+00> : vector<2x128xf32>
    %34 = tpu.matmul %32, %33, %cst_12 {dimension_numbers = #tpu.dot_dimension_numbers<[1], [0], [0], [1], [0, 0, 1, 1], [], []>} : vector<2x32xbf16>, vector<32x128xbf16>, vector<2x128xf32> -> vector<2x128xf32>
    %c0_13 = arith.constant 0 : index
    %c0_14 = arith.constant 0 : index
    %35 = vector.load %arg4[%c0_13, %c0_14] : memref<1x128xf32, #tpu.memory_space<vmem>>, vector<1x128xf32>
    %36 = vector.broadcast %35 : vector<1x128xf32> to vector<2x128xf32>
    %37 = arith.addf %34, %36 : vector<2x128xf32>
    %c0_15 = arith.constant 0 : index
    %c0_16 = arith.constant 0 : index
    %38 = vector.load %arg5[%c0_15, %c0_16] : memref<2x128xf32, #tpu.memory_space<vmem>>, vector<2x128xf32>
    tpu.vector_store %arg5[%c0_15, %c0_16], %37 {strides = array<i32>} : memref<2x128xf32, #tpu.memory_space<vmem>>, vector<2x128xf32>,
    return
  }
  func.func @transform_0(%arg0: i32) -> (i32, i32, i32) {
    %c0_i32 = arith.constant 0 : i32
    %c0_i32_0 = arith.constant 0 : i32
    %c0_i32_1 = arith.constant 0 : i32
    %c0_i32_2 = arith.constant 0 : i32
    return %c0_i32, %c0_i32_0, %c0_i32_1 : i32, i32, i32
  }
  func.func @transform_1(%arg0: i32) -> (i32, i32) {
    %c0_i32 = arith.constant 0 : i32
    %c0_i32_0 = arith.constant 0 : i32
    %c0_i32_1 = arith.constant 0 : i32
    return %c0_i32, %c0_i32_0 : i32, i32
  }
  func.func @transform_2(%arg0: i32) -> (i32, i32) {
    %c0_i32 = arith.constant 0 : i32
    %c0_i32_0 = arith.constant 0 : i32
    %c0_i32_1 = arith.constant 0 : i32
    return %c0_i32, %c0_i32_0 : i32, i32
  }
  func.func @transform_3(%arg0: i32) -> (i32, i32) {
    %c0_i32 = arith.constant 0 : i32
    %c0_i32_0 = arith.constant 0 : i32
    %c0_i32_1 = arith.constant 0 : i32
    return %c0_i32, %c0_i32_0 : i32, i32
  }
  func.func @transform_4(%arg0: i32) -> (i32, i32) {
    %c0_i32 = arith.constant 0 : i32
    %c0_i32_0 = arith.constant 0 : i32
    %c0_i32_1 = arith.constant 0 : i32
    return %c0_i32, %c0_i32_0 : i32, i32
  }
}

</mosaic_0001>

<llo_original>
// kernel: tpu_custom_call.1
$region0: #{tpu_custom_call.1}
  #allocation0 [shape = 'u32[]', space=smem, size = 0x4, offset = 0x4, fixed_abs, tag = 'smem constant byte address 0x4 - core index']
  #allocation1 [shape = 'u32[144,128]{1,0:T(1,128)}', space=vmem, size = 0x12000, scoped, tag = 'internal scratch']
  %s0 = inlined_call_operand.hbm [shape: f32[2,8,32], index: 0, kind: input, shape index: {}]
  %s1 = inlined_call_operand.vmem [shape: f32[2,8], index: 1, kind: input, shape index: {}]
  %s2 = inlined_call_operand.hbm [shape: bf16[32,128], index: 2, kind: input, shape index: {}]
  %s3 = inlined_call_operand.vmem [shape: f32[1,128], index: 3, kind: input, shape index: {}]
  %s4 = inlined_call_operand.hbm [shape: f32[2,128], index: 4, kind: output, shape index: {}]
  %s5 = sld [smem:[#allocation0]]
  $region34: #{tpu_custom_call.1} parent=0
    _
  %s7 = ssub.s32 1, %s5
  %s8 = scalar_select 0, %s7, %s5
  $region1: #{tpu_custom_call.1} parent=0
    #allocation2 [shape = 'u8[8192]{0}', space=vmem, size = 0x2000, scoped, tag = 'input window, operand 0, single buffered']
    #allocation3 [shape = 's32[1]{0}', space=sflag, size = 0x4, scoped, tag = 'scoped memory for tpu_custom_call.1']
    #allocation4 [shape = 's32[1]{0}', space=sflag, size = 0x4, scoped, tag = 'scoped memory for tpu_custom_call.1']
    #allocation5 [shape = 'u8[8192]{0}', space=vmem, size = 0x2000, scoped, tag = 'input window, operand 2, single buffered']
    #allocation6 [shape = 's32[1]{0}', space=sflag, size = 0x4, scoped, tag = 'scoped memory for tpu_custom_call.1']
    #allocation7 [shape = 'u8[1024]{0}', space=vmem, size = 0x400, scoped, tag = 'output window, operand 0, single buffered']
    %9 = vsyncpa [#allocation3], 0
    %10 = vsyncpa [#allocation6], 0
    %11 = vsyncpa [#allocation4], 0
    // Predicated region
    $region2: #{tpu_custom_call.1} parent=1 // pred_check
      _
    $region3: #{tpu_custom_call.1} parent=1 // pred_check_branch
      %13 = sbr.rel (0) target = $region5
    $region4: #{tpu_custom_call.1} parent=1 // pred_region
      %s15 = ssub.s32 256, 256
      %16 = vsyncadd [#allocation3], %s15
      %s17 = sshll.u32 [#allocation2], 4
      %s18 = int_to_ptr.vmem [resolvable:$true] %s17
      %23 = dma.hbm_to_vmem [thread:$0]  %s0, 256, %s18, [#allocation3], 128, 128, 8
    $region5: #{tpu_custom_call.1} parent=1 // pred_fallthru
      _
    // Predicated region
    $region6: #{tpu_custom_call.1} parent=1 // pred_check
      _
    $region7: #{tpu_custom_call.1} parent=1 // pred_check_branch
      %25 = sbr.rel (0) target = $region9
    $region8: #{tpu_custom_call.1} parent=1 // pred_region
      _
    $region9: #{tpu_custom_call.1} parent=1 // pred_fallthru
      _
    // Predicated region
    $region10: #{tpu_custom_call.1} parent=1 // pred_check
      _
    $region11: #{tpu_custom_call.1} parent=1 // pred_check_branch
      %27 = sbr.rel (0) target = $region13
    $region12: #{tpu_custom_call.1} parent=1 // pred_region
      %s29 = ssub.s32 256, 256
      %30 = vsyncadd [#allocation6], %s29
      %s31 = sshll.u32 [#allocation5], 4
      %s32 = int_to_ptr.vmem [resolvable:$true] %s31
      %37 = dma.hbm_to_vmem [thread:$0]  %s2, 256, %s32, [#allocation6], 64, 64, 4
    $region13: #{tpu_custom_call.1} parent=1 // pred_fallthru
      _
    // Predicated region
    $region14: #{tpu_custom_call.1} parent=1 // pred_check
      _
    $region15: #{tpu_custom_call.1} parent=1 // pred_check_branch
      %39 = sbr.rel (0) target = $region17
    $region16: #{tpu_custom_call.1} parent=1 // pred_region
      _
    $region17: #{tpu_custom_call.1} parent=1 // pred_fallthru
      _
    // Predicated region
    $region18: #{tpu_custom_call.1} parent=1 // pred_check
      _
    $region19: #{tpu_custom_call.1} parent=1 // pred_check_branch
      %41 = sbr.rel (0) target = $region21
    $region20: #{tpu_custom_call.1} parent=1 // pred_region
      %42 = dma.done [#allocation3], 256
    $region21: #{tpu_custom_call.1} parent=1 // pred_fallthru
      _
    // Predicated region
    $region22: #{tpu_custom_call.1} parent=1 // pred_check
      _
    $region23: #{tpu_custom_call.1} parent=1 // pred_check_branch
      %44 = sbr.rel (0) target = $region25
    $region24: #{tpu_custom_call.1} parent=1 // pred_region
      %45 = dma.done [#allocation6], 256
    $region25: #{tpu_custom_call.1} parent=1 // pred_fallthru
      _
    %v47 = vld [vmem:[#allocation2] sm:$0xff]
    %v48 = vld [vmem:[#allocation2 + $0x8] sm:$0xff]
    %v49 = vld [vmem:[%s1] sm:$0x3]
    %v50 = vlaneseq
    %v51 = vshrl.u32 %v50, 7
    %v52 = vsub.s32 0, %v51
    %v53 = vrot.slane %v47, %v52
    %v54 = vlaneseq
    %v55 = vshrl.u32 %v54, 7
    %v56 = vsub.s32 0, %v55
    %v57 = vrot.slane %v48, %v56
    %v58 = vmul.f32 %v53, %v47
    %v59 = vmul.f32 %v57, %v48
    %vm60 = vcmask 261120
    %v61 = vsel %vm60, %v58, 0.0
    %62 = vadd.xlane.f32.xlu0 %v61
    %v63 = vpop.xlane.xlu0 %62
    %v64 = vsel %vm60, %v59, 0.0
    %65 = vadd.xlane.f32.xlu0 %v64
    %v66 = vpop.xlane.xlu0 %65
    %v67 = vmul.f32 %v63, 0.17677669
    %v68 = vmul.f32 %v66, 0.17677669
    %v69 = vlaneseq
    %v70 = vand.u32 %v69, 127
    %vm71 = vcmp.eq.s32.totalorder %v70, 0
    %vm72 = vcmp.gt.f32.partialorder %v49, 0.5
    %vm73 = vmand %vm71, %vm72
    %v76 = vlaneseq
    %v77 = vshrl.u32 %v76, 7
    %v78 = vsub.s32 %v70, %v77
    %v79 = vrot.slane %v67, %v78
    %v80 = vlaneseq
    %v81 = vshrl.u32 %v80, 7
    %v82 = vsub.s32 %v70, %v81
    %v83 = vrot.slane %v68, %v82
    %vm84 = vcmask 1041409
    %v85 = vsel %vm84, %v83, %v79
    %v87 = vsel %vm73, %v85, -1e+30
    %vm88 = vcmask 58368
    %v89 = vsel %vm88, %v87, -inf
    %90 = vmax.xlane.f32.xlu0 %v89
    %v91 = vpop.xlane.xlu0 %90
    %v92 = vsub.f32 %v87, %v91
    %v93 = vmul.f32 %v92, 1.442695
    %v94 = vpow.pop %v93
    %v95 = vsel %vm88, %v94, 0.0
    %96 = vadd.xlane.f32.xlu0 %v95
    %v97 = vpop.xlane.xlu0 %96
    %v98 = vrcp.pop %v97
    %v99 = vmul.f32 %v94, %v98
    %v100 = vlaneseq
    %v101 = vshrl.u32 %v100, 7
    %v102 = vsub.s32 0, %v101
    %v103 = vrot.slane %v99, %v102
    %105 = vbcast.lane.b32.xlu0 %v103, 256
    %v106 = vpop.permute.xlu0 %105
    %v107 = vlaneseq
    %v108 = vshrl.u32 %v107, 7
    %v109 = vsub.s32 1, %v108
    %v110 = vrot.slane %v99, %v109
    %112 = vbcast.lane.b32.xlu0 %v110, 256
    %v113 = vpop.permute.xlu0 %112
    %v114 = vmul.f32 %v106, %v47
    %v115 = vmul.f32 %v113, %v48
    %v116 = vsel %vm60, %v114, 0.0
    %v117 = vrot.slane %v116, 4
    %v118 = vadd.f32 %v116, %v117
    %v119 = vrot.slane %v118, 2
    %v120 = vadd.f32 %v118, %v119
    %v121 = vrot.slane %v120, 1
    %v122 = vadd.f32 %v120, %v121
    %v123 = vsel %vm60, %v115, 0.0
    %v124 = vrot.slane %v123, 4
    %v125 = vadd.f32 %v123, %v124
    %v126 = vrot.slane %v125, 2
    %v127 = vadd.f32 %v125, %v126
    %v128 = vrot.slane %v127, 1
    %v129 = vadd.f32 %v127, %v128
    %v130 = vpack.c.bf16 %v122, %v122
    %v131 = vpack.c.bf16 %v129, %v129
    %v132 = vld [vmem:[#allocation5] sm:$0xf]
    %v133 = vld [vmem:[#allocation5 + $0x4] sm:$0xf]
    %v134 = vld [vmem:[#allocation5 + $0x8] sm:$0xf]
    %v135 = vld [vmem:[#allocation5 + $0xc] sm:$0xf]
    %v136 = vld [vmem:[%s3] sm:$0x1]
    %v138 = vlaneseq
    %v139 = vshrl.u32 %v138, 7
    %v140 = vsub.s32 0, %v139
    %v141 = vrot.slane %v136, %v140
    %v145 = vunpack.c.l.b16 %v130
    %v146 = vunpack.c.l.b16 %v131
    %v147 = vsel %vm84, %v146, %v145
    %v148 = vpack.c.b16 %v147, %v147
    %v153 = vunpack.c.l.b16 %v132
    %v154 = vunpack.c.l.b16 %v133
    %v155 = vunpack.c.l.b16 %v134
    %v156 = vunpack.c.l.b16 %v135
    %v157 = vpack.c.b16 %v154, %v153
    %v158 = vpack.c.b16 %v156, %v155
    %v162 = vsel %vm60, %v148, 0
    %164 = vmatprep.subr.bf16.mxu0 0
    %165 = vmatpush1.bf16.msra.mxu0 %v157
    %166 = vmatprep.subr.bf16.mxu0 0
    %167 = vmatpush1.bf16.msra.mxu0 %v158
    %168 = vmatprep.subr.bf16.mxu0 0
    %169 = vmatpush1.bf16.msra.mxu0 0
    %170 = vmatprep.subr.bf16.mxu0 0
    %171 = vmatpush1.bf16.msra.mxu0 0
    %172 = vmatprep.subr.bf16.mxu0 0
    %173 = vmatpush1.bf16.msra.mxu0 0
    %174 = vmatprep.subr.bf16.mxu0 0
    %175 = vmatpush1.bf16.msra.mxu0 0
    %176 = vmatprep.subr.bf16.mxu0 0
    %177 = vmatpush1.bf16.msra.mxu0 0
    %178 = vmatprep.subr.bf16.mxu0 0
    %179 = vmatpush1.bf16.msra.mxu0 0
    %180 = vmatprep.subr.bf16.mxu0 0
    %181 = vmatpush1.bf16.msra.mxu0 0
    %182 = vmatprep.subr.bf16.mxu0 0
    %183 = vmatpush1.bf16.msra.mxu0 0
    %184 = vmatprep.subr.bf16.mxu0 0
    %185 = vmatpush1.bf16.msra.mxu0 0
    %186 = vmatprep.subr.bf16.mxu0 0
    %187 = vmatpush1.bf16.msra.mxu0 0
    %188 = vmatprep.subr.bf16.mxu0 0
    %189 = vmatpush1.bf16.msra.mxu0 0
    %190 = vmatprep.subr.bf16.mxu0 0
    %191 = vmatpush1.bf16.msra.mxu0 0
    %192 = vmatprep.subr.bf16.mxu0 0
    %193 = vmatpush1.bf16.msra.mxu0 0
    %194 = vmatprep.subr.bf16.mxu0 0
    %195 = vmatpush1.bf16.msra.mxu0 0
    %196 = vmatprep.mubr.bf16.mxu0 0
    %197 = vmatmul.mubr.bf16.gmra.mrb[0].mxu0 %v162
    %v198 = vpop.f32.mrb[0].mxu0
    %v199 = vadd.f32 %v141, %v198
    %v200 = vpop.f32.mrb[0].mxu0
    %v201 = vpop.f32.mrb[0].mxu0
    %v202 = vpop.f32.mrb[0].mxu0
    %203 = vdwg.mxu0
    %204 = vst [vmem:[#allocation7] sm:$0x3] %v199
    // Predicated region
    $region26: #{tpu_custom_call.1} parent=1 // pred_check
      _
    $region27: #{tpu_custom_call.1} parent=1 // pred_check_branch
      %206 = sbr.rel (0) target = $region29
    $region28: #{tpu_custom_call.1} parent=1 // pred_region
      %s208 = ssub.s32 32, 32
      %209 = vsyncadd [#allocation4], %s208
      %s211 = sshll.u32 [#allocation7], 4
      %s212 = int_to_ptr.vmem [resolvable:$true] %s211
      %214 = dma.vmem_to_hbm [thread:$0]  %s212, 32, %s4, [#allocation4]
    $region29: #{tpu_custom_call.1} parent=1 // pred_fallthru
      _
    // Predicated region
    $region30: #{tpu_custom_call.1} parent=1 // pred_check
      _
    $region31: #{tpu_custom_call.1} parent=1 // pred_check_branch
      %216 = sbr.rel (0) target = $region33
    $region32: #{tpu_custom_call.1} parent=1 // pred_region
      %217 = dma.done [#allocation4], 32
    $region33: #{tpu_custom_call.1} parent=1 // pred_fallthru
      _
    %218 = vsyncpa [#allocation3], 1
    %219 = vsyncpa [#allocation6], 1
    %220 = vsyncpa [#allocation4], 1

</llo_original>
